<compile_context>
chip_gen: v7x
topology: tpu7x:2x2x1
jax: 0.10.0
libtpu: 0.0.40
codegen_flags: <defaults>
</compile_context>

<pallas_src>
import functools

import jax
import jax.numpy as jnp
from jax.experimental import pallas as pl
from jax.experimental.pallas import tpu as pltpu

_SEM_2D = pltpu.CompilerParams(dimension_semantics=("parallel", "parallel"))
_SEM_3D = pltpu.CompilerParams(
    dimension_semantics=("parallel", "parallel", "arbitrary"))
_SEM_1D = pltpu.CompilerParams(dimension_semantics=("parallel",))


def _round_up(x, m):
    return (x + m - 1) // m * m


# ---------------------------------------------------------------------------
# Pallas kernels
# ---------------------------------------------------------------------------
def _mm1_kernel(a_ref, b_ref, c_ref, o_ref, *, relu):
    """Single-K-tile: o = act(A @ B + bias).  BN scale is pre-folded into B."""
    out = jnp.dot(a_ref[...], b_ref[...],
                  preferred_element_type=jnp.float32) + c_ref[...]
    if relu:
        out = jnp.maximum(out, 0.0)
    o_ref[...] = out.astype(o_ref.dtype)


def _mm1_res_kernel(a_ref, b_ref, c_ref, r_ref, o_ref):
    """Single-K-tile: o = relu(A @ B + bias + residual)  -- BasicBlock identity tail."""
    out = (jnp.dot(a_ref[...], b_ref[...], preferred_element_type=jnp.float32)
           + c_ref[...] + r_ref[...].astype(jnp.float32))
    o_ref[...] = jnp.maximum(out, 0.0).astype(o_ref.dtype)


def _mm1_down_kernel(a_ref, b_ref, c_ref, dx_ref, dw_ref, dc_ref, o_ref):
    """Single-K-tile: o = relu(A @ B + bias + (DX @ DW + dbias)) -- fused 1x1 downsample."""
    res = jnp.dot(dx_ref[...], dw_ref[...],
                  preferred_element_type=jnp.float32) + dc_ref[...]
    out = (jnp.dot(a_ref[...], b_ref[...], preferred_element_type=jnp.float32)
           + c_ref[...] + res)
    o_ref[...] = jnp.maximum(out, 0.0).astype(o_ref.dtype)


def _mmk_kernel(a_ref, b_ref, c_ref, o_ref, acc_ref, *, relu):
    """K-tiled fallback (K > 4608 only): f32 accumulator, init/fin via pl.when."""
    k = pl.program_id(2)

    @pl.when(k == 0)
    def _init():
        acc_ref[...] = jnp.zeros_like(acc_ref)

    acc_ref[...] += jnp.dot(a_ref[...], b_ref[...],
                            preferred_element_type=jnp.float32)

    @pl.when(k == pl.num_programs(2) - 1)
    def _fin():
        out = acc_ref[...] + c_ref[...]
        if relu:
            out = jnp.maximum(out, 0.0)
        o_ref[...] = out.astype(o_ref.dtype)


def _maxpool_kernel(p_ref, o_ref):
    """p: (KK, tm, C) window slabs -> max over KK in one grid step."""
    o_ref[...] = jnp.max(p_ref[...], axis=0)


# ---------------------------------------------------------------------------
# Tiled matmul wrapper (convs / downsample / FC all route through here)
# ---------------------------------------------------------------------------
def _tiles(M, K, N, force_full_k=False):
    # N (lane) dim is already padded to a multiple of 128 by prepare_params.
    tn = 256 if (N >= 512 and N % 256 == 0) else N
    # M dim: multiple of 16 (bf16 sublane packing); 256-row tiles when large.
    Mp = _round_up(M, 16)
    if Mp > 256:
        tm = 256
        Mp = _round_up(M, 256)
    else:
        tm = Mp
    # K: single full-K tile up to 4608 (covers every layer of this net).
    if force_full_k or K <= 4608:
        Kp = _round_up(K, 8)
        tk = Kp
    else:
        Kp = _round_up(K, 512)
        tk = 512
    return Mp, Kp, tm, tk, tn


def matmul_fused(a, b, bias, *, relu=False, residual=None, down=None,
                 out_dtype=jnp.bfloat16):
    """act(a @ b + bias [+ residual | + fused 1x1 downsample]); bf16 MXU, f32 epilogue.

    `b` (K, N) bf16 and `bias` (1, N) f32 come pre-padded (N multiple of 128, >=128)
    with the BN scale already folded into `b`'s columns."""
    M, K = a.shape
    Kb, N = b.shape
    assert K == Kb and N % 128 == 0 and N >= 128
    force_full_k = (residual is not None) or (down is not None)
    Mp, Kp, tm, tk, tn = _tiles(M, K, N, force_full_k)
    nm, nn, nk = Mp // tm, N // tn, Kp // tk

    a_p = a.astype(jnp.bfloat16)
    if Mp != M or Kp != K:
        a_p = jnp.pad(a_p, ((0, Mp - M), (0, Kp - K)))
    b_p = b if Kp == K else jnp.pad(b, ((0, Kp - K), (0, 0)))

    if nk == 1:
        a_spec = pl.BlockSpec((tm, Kp), lambda i, j: (i, 0))
        b_spec = pl.BlockSpec((Kp, tn), lambda i, j: (0, j))
        c_spec = pl.BlockSpec((1, tn), lambda i, j: (0, j))
        if down is not None:
            dx, dw, dbias = down
            Kd = dw.shape[0]
            dx_p = dx.astype(jnp.bfloat16)
            if Mp != M:
                dx_p = jnp.pad(dx_p, ((0, Mp - M), (0, 0)))
            kernel = _mm1_down_kernel
            in_specs = [a_spec, b_spec, c_spec,
                        pl.BlockSpec((tm, Kd), lambda i, j: (i, 0)),
                        pl.BlockSpec((Kd, tn), lambda i, j: (0, j)),
                        pl.BlockSpec((1, tn), lambda i, j: (0, j))]
            args = [a_p, b_p, bias, dx_p, dw, dbias]
        elif residual is not None:
            r_p = residual.astype(jnp.bfloat16)
            if Mp != M:
                r_p = jnp.pad(r_p, ((0, Mp - M), (0, 0)))
            kernel = _mm1_res_kernel
            in_specs = [a_spec, b_spec, c_spec,
                        pl.BlockSpec((tm, tn), lambda i, j: (i, j))]
            args = [a_p, b_p, bias, r_p]
        else:
            kernel = functools.partial(_mm1_kernel, relu=relu)
            in_specs = [a_spec, b_spec, c_spec]
            args = [a_p, b_p, bias]
        out = pl.pallas_call(
            kernel,
            out_shape=jax.ShapeDtypeStruct((Mp, N), out_dtype),
            grid=(nm, nn),
            in_specs=in_specs,
            out_specs=pl.BlockSpec((tm, tn), lambda i, j: (i, j)),
            compiler_params=_SEM_2D,
        )(*args)
    else:
        assert residual is None and down is None
        out = pl.pallas_call(
            functools.partial(_mmk_kernel, relu=relu),
            out_shape=jax.ShapeDtypeStruct((Mp, N), out_dtype),
            grid=(nm, nn, nk),
            in_specs=[pl.BlockSpec((tm, tk), lambda i, j, k: (i, k)),
                      pl.BlockSpec((tk, tn), lambda i, j, k: (k, j)),
                      pl.BlockSpec((1, tn), lambda i, j, k: (0, j))],
            out_specs=pl.BlockSpec((tm, tn), lambda i, j, k: (i, j)),
            scratch_shapes=[pltpu.VMEM((tm, tn), jnp.float32)],
            compiler_params=_SEM_3D,
        )(a_p, b_p, bias)
    return out if Mp == M else out[:M]


# ---------------------------------------------------------------------------
# Conv / pooling glue
# ---------------------------------------------------------------------------
def _im2col(x, kh, kw, stride, padding, cin):
    """x: NHWC -> (N*Ho*Wo, kh*kw*cin) patches (XLA glue, static strided slices)."""
    N, H, W, C = x.shape
    if C < cin:
        x = jnp.pad(x, ((0, 0), (0, 0), (0, 0), (0, cin - C)))
        C = cin
    xp = jnp.pad(x, ((0, 0), (padding, padding), (padding, padding), (0, 0)))
    Ho = (H + 2 * padding - kh) // stride + 1
    Wo = (W + 2 * padding - kw) // stride + 1
    slabs = []
    for i in range(kh):
        for j in range(kw):
            slabs.append(
                xp[:, i: i + stride * (Ho - 1) + 1: stride,
                      j: j + stride * (Wo - 1) + 1: stride, :].reshape(N * Ho * Wo, C))
    cols = jnp.concatenate(slabs, axis=1)
    return cols, (N, Ho, Wo)


def conv_bn(x, pc, *, relu=True, residual=None, down=None):
    """Conv2d(bias=False)+BatchNorm2d(eval) [+ residual | fused downsample] [+ ReLU]."""
    cols, (N, Ho, Wo) = _im2col(x, pc["kh"], pc["kw"], pc["stride"],
                                pc["padding"], pc["cin"])
    M = N * Ho * Wo
    res2d = None if residual is None else residual.reshape(M, residual.shape[-1])
    out = matmul_fused(cols, pc["w"], pc["b"], relu=relu,
                       residual=res2d, down=down)
    return out.reshape(N, Ho, Wo, pc["w"].shape[1])


def maxpool2d(x, k=3, stride=2, pad=1):
    """MaxPool2d(3, stride=2, padding=1): all 9 windows reduced in one grid step."""
    N, H, W, C = x.shape
    xp = jnp.pad(x, ((0, 0), (pad, pad), (pad, pad), (0, 0)),
                 constant_values=-jnp.inf)
    Ho = (H + 2 * pad - k) // stride + 1
    Wo = (W + 2 * pad - k) // stride + 1
    slabs = []
    for i in range(k):
        for j in range(k):
            slabs.append(
                xp[:, i: i + stride * (Ho - 1) + 1: stride,
                      j: j + stride * (Wo - 1) + 1: stride, :])
    M = N * Ho * Wo
    pat = jnp.stack(slabs, axis=0).reshape(k * k, M, C)
    Mp = _round_up(M, 16)
    if Mp > 512:
        tm = 512
        Mp = _round_up(M, 512)
    else:
        tm = Mp
    if Mp != M:
        pat = jnp.pad(pat, ((0, 0), (0, Mp - M), (0, 0)),
                      constant_values=-jnp.inf)
    out = pl.pallas_call(
        _maxpool_kernel,
        out_shape=jax.ShapeDtypeStruct((Mp, C), x.dtype),
        grid=(Mp // tm,),
        in_specs=[pl.BlockSpec((k * k, tm, C), lambda i: (0, i, 0))],
        out_specs=pl.BlockSpec((tm, C), lambda i: (i, 0)),
        compiler_params=_SEM_1D,
    )(pat)
    if Mp != M:
        out = out[:M]
    return out.reshape(N, Ho, Wo, C)


# ---------------------------------------------------------------------------
# Model: raw parameters (PyTorch init), kernel-ready parameters, forward
# ---------------------------------------------------------------------------
PLANES = (64, 128, 256, 512)
LAYERS = (2, 2, 2, 2)
NUM_CLASSES = 10


def _kaiming_conv(key, cout, cin, kh, kw):
    # kaiming_normal_(mode='fan_out', nonlinearity='relu')
    fan_out = cout * kh * kw
    std = (2.0 / fan_out) ** 0.5
    return std * jax.random.normal(key, (cout, cin, kh, kw), jnp.float32)


def _bn_params(c):
    # (gamma=1, beta=0, running_mean=0, running_var=1) -- inference-mode BN.
    # TODO(synk): training-mode BatchNorm (batch statistics + running-stat update) not implemented.
    return (jnp.ones((c,), jnp.float32), jnp.zeros((c,), jnp.float32),
            jnp.zeros((c,), jnp.float32), jnp.ones((c,), jnp.float32))


def init_params(key):
    keys = iter(jax.random.split(key, 64))
    params = {"conv1": _kaiming_conv(next(keys), PLANES[0], 3, 7, 7),
              "bn1": _bn_params(PLANES[0])}
    inplanes = PLANES[0]
    stages = []
    for si, (p, nblocks) in enumerate(zip(PLANES, LAYERS)):
        first_stride = 1 if si == 0 else 2
        blocks = []
        for bi in range(nblocks):
            s = first_stride if bi == 0 else 1
            blk = {"stride": s,
                   "w1": _kaiming_conv(next(keys), p, inplanes, 3, 3),
                   "bn1": _bn_params(p),
                   "w2": _kaiming_conv(next(keys), p, p, 3, 3),
                   "bn2": _bn_params(p)}
            if s != 1 or inplanes != p:
                blk["down_w"] = _kaiming_conv(next(keys), p, inplanes, 1, 1)
                blk["down_bn"] = _bn_params(p)
            blocks.append(blk)
            inplanes = p
        stages.append(blocks)
    params["stages"] = stages
    bound = 1.0 / (PLANES[-1] ** 0.5)  # default nn.Linear init
    params["fc_w"] = jax.random.uniform(next(keys), (NUM_CLASSES, PLANES[-1]),
                                        jnp.float32, -bound, bound)
    params["fc_b"] = jax.random.uniform(next(keys), (NUM_CLASSES,),
                                        jnp.float32, -bound, bound)
    return params


def _fold_bn(bn):
    gamma, beta, mean, var = bn
    scale = gamma / jnp.sqrt(var + 1e-5)
    bias = beta - mean * scale
    return scale, bias


def _prep_conv(w, bn, cin_pad_to, cout_pad_to, stride, padding):
    """Fold BN scale into the weight columns, pad in/out channels, cast bf16 -- once."""
    cout, cin, kh, kw = w.shape
    scale, bias = _fold_bn(bn)
    wt = jnp.transpose(w, (2, 3, 1, 0)) * scale              # (kh,kw,cin,cout) * scale
    wt = jnp.pad(wt, ((0, 0), (0, 0), (0, cin_pad_to - cin),
                      (0, cout_pad_to - cout)))
    wmat = wt.reshape(kh * kw * cin_pad_to, cout_pad_to).astype(jnp.bfloat16)
    b = jnp.pad(bias, (0, cout_pad_to - cout)).reshape(1, cout_pad_to)
    return {"w": wmat, "b": b.astype(jnp.float32), "kh": kh, "kw": kw,
            "cin": cin_pad_to, "stride": stride, "padding": padding}


def prepare_params(params):
    """All weight-side preprocessing hoisted out of forward(); channels padded to >=128."""
    prep = {"conv1": _prep_conv(params["conv1"], params["bn1"],
                                cin_pad_to=8, cout_pad_to=128, stride=2, padding=3)}
    in_pad = 128
    stages = []
    for blocks in params["stages"]:
        pblocks = []
        for blk in blocks:
            cout = blk["w1"].shape[0]
            cout_pad = max(128, cout)
            pb = {"stride": blk["stride"],
                  "conv1": _prep_conv(blk["w1"], blk["bn1"], in_pad, cout_pad,
                                      blk["stride"], 1),
                  "conv2": _prep_conv(blk["w2"], blk["bn2"], cout_pad, cout_pad, 1, 1)}
            if "down_w" in blk:
                dprep = _prep_conv(blk["down_w"], blk["down_bn"], in_pad, cout_pad,
                                   blk["stride"], 0)
                pb["down_w"] = dprep["w"]          # (in_pad, cout_pad) bf16
                pb["down_b"] = dprep["b"]          # (1, cout_pad) f32
            pblocks.append(pb)
            in_pad = cout_pad
        stages.append(pblocks)
    prep["stages"] = stages
    prep["fc_w"] = jnp.pad(params["fc_w"].T,
                           ((0, 0), (0, 128 - NUM_CLASSES))).astype(jnp.bfloat16)
    prep["fc_b"] = jnp.pad(params["fc_b"],
                           (0, 128 - NUM_CLASSES)).reshape(1, 128).astype(jnp.float32)
    return prep


def basic_block(x, blk):
    """torchvision BasicBlock forward (expansion = 1)."""
    s = blk["stride"]
    out1 = conv_bn(x, blk["conv1"], relu=True)
    if "down_w" in blk:
        # Fuse the 1x1 stride-s downsample + its BN into conv2's epilogue: no separate
        # pallas_call, no HBM round trip of the identity tensor.
        xd = x[:, ::s, ::s, :]
        Nd, Hd, Wd, Cin = xd.shape
        dx = xd.reshape(Nd * Hd * Wd, Cin)
        out = conv_bn(out1, blk["conv2"], relu=True,
                      down=(dx, blk["down_w"], blk["down_b"]))
    else:
        out = conv_bn(out1, blk["conv2"], relu=True, residual=x)
    return out


def forward(prep, x_nchw):
    x = jnp.transpose(x_nchw, (0, 2, 3, 1)).astype(jnp.bfloat16)   # NCHW -> NHWC bf16
    x = conv_bn(x, prep["conv1"], relu=True)
    x = maxpool2d(x, k=3, stride=2, pad=1)
    for blocks in prep["stages"]:
        for blk in blocks:
            x = basic_block(x, blk)
    # Fused AdaptiveAvgPool2d((1,1)) + flatten + Linear: mean over HW then Linear ==
    # Linear with FC weights tiled over HW and scaled by 1/HW (exact; f32 accumulation).
    N, H, W, C = x.shape
    HW = H * W
    a = x.reshape(N, HW * C)
    w = prep["fc_w"] if HW == 1 else jnp.tile(prep["fc_w"], (HW, 1)) * (1.0 / HW)
    logits = matmul_fused(a, w, prep["fc_b"], relu=False, out_dtype=jnp.float32)
    return logits[:, :NUM_CLASSES]                                   # (N, 10) f32


if __name__ == "__main__":
    key = jax.random.PRNGKey(0)
    k_param, k_x = jax.random.split(key)
    params = init_params(k_param)
    prep = prepare_params(params)            # one-time weight prep (outside forward)
    x = jax.random.normal(k_x, (2, 3, 32, 32), jnp.float32)  # NCHW, like PyTorch
    out = forward(prep, x)
    out = jax.block_until_ready(out)
    assert out.shape == (2, NUM_CLASSES), out.shape
    assert bool(jnp.all(jnp.isfinite(out)))
    print("KERNEL_OK")
</pallas_src>

<mosaic_0001>
module attributes {stable_mosaic.version = 11 : i64} {
  func.func @_mm1_kernel(%arg0: i32, %arg1: i32, %arg2: memref<256x392xbf16, #tpu.memory_space<vmem>>, %arg3: memref<392x128xbf16, #tpu.memory_space<vmem>>, %arg4: memref<1x128xf32, #tpu.memory_space<vmem>>, %arg5: memref<256x128xbf16, #tpu.memory_space<vmem>>) attributes {dimension_semantics = [#tpu.dimension_semantics<parallel>, #tpu.dimension_semantics<parallel>], iteration_bounds = array<i64: 2, 1>, scalar_prefetch = 0 : i64, scratch_operands = 0 : i64, tpu.core_type = #tpu.core_type<tc>, window_params = [{transform_indices = @transform_0, window_bounds = array<i64: 256, 392>}, {transform_indices = @transform_1, window_bounds = array<i64: 392, 128>}, {transform_indices = @transform_2, window_bounds = array<i64: 1, 128>}, {transform_indices = @transform_3, window_bounds = array<i64: 256, 128>}]} {
    %c0 = arith.constant 0 : index
    %c0_0 = arith.constant 0 : index
    %0 = vector.load %arg2[%c0, %c0_0] : memref<256x392xbf16, #tpu.memory_space<vmem>>, vector<256x392xbf16>
    %c0_1 = arith.constant 0 : index
    %c0_2 = arith.constant 0 : index
    %1 = vector.load %arg3[%c0_1, %c0_2] : memref<392x128xbf16, #tpu.memory_space<vmem>>, vector<392x128xbf16>
    %cst = arith.constant dense<0.000000e+00> : vector<256x128xf32>
    %2 = tpu.matmul %0, %1, %cst {dimension_numbers = #tpu.dot_dimension_numbers<[1], [0], [0], [1], [0, 0, 1, 1], [], []>} : vector<256x392xbf16>, vector<392x128xbf16>, vector<256x128xf32> -> vector<256x128xf32>
    %c0_3 = arith.constant 0 : index
    %c0_4 = arith.constant 0 : index
    %3 = vector.load %arg4[%c0_3, %c0_4] : memref<1x128xf32, #tpu.memory_space<vmem>>, vector<1x128xf32>
    %4 = vector.broadcast %3 : vector<1x128xf32> to vector<256x128xf32>
    %5 = arith.addf %2, %4 : vector<256x128xf32>
    %cst_5 = arith.constant 0.000000e+00 : f32
    %6 = vector.broadcast %cst_5 : f32 to vector<256x128xf32>
    %7 = arith.maximumf %5, %6 : vector<256x128xf32>
    %8 = arith.truncf %7 : vector<256x128xf32> to vector<256x128xbf16>
    %c0_6 = arith.constant 0 : index
    %c0_7 = arith.constant 0 : index
    %9 = vector.load %arg5[%c0_6, %c0_7] : memref<256x128xbf16, #tpu.memory_space<vmem>>, vector<256x128xbf16>
    tpu.vector_store %arg5[%c0_6, %c0_7], %8 {strides = array<i32>} : memref<256x128xbf16, #tpu.memory_space<vmem>>, vector<256x128xbf16>,
    return
  }
  func.func @transform_0(%arg0: i32, %arg1: i32) -> (i32, i32) {
    %c0_i32 = arith.constant 0 : i32
    %c0_i32_0 = arith.constant 0 : i32
    return %arg0, %c0_i32 : i32, i32
  }
  func.func @transform_1(%arg0: i32, %arg1: i32) -> (i32, i32) {
    %c0_i32 = arith.constant 0 : i32
    %c0_i32_0 = arith.constant 0 : i32
    return %c0_i32, %arg1 : i32, i32
  }
  func.func @transform_2(%arg0: i32, %arg1: i32) -> (i32, i32) {
    %c0_i32 = arith.constant 0 : i32
    %c0_i32_0 = arith.constant 0 : i32
    return %c0_i32, %arg1 : i32, i32
  }
  func.func @transform_3(%arg0: i32, %arg1: i32) -> (i32, i32) {
    %c0_i32 = arith.constant 0 : i32
    return %arg0, %arg1 : i32, i32
  }
}

</mosaic_0001>

<llo_original>
// kernel: tpu_custom_call.1
$region0: #{tpu_custom_call.1}
  #allocation0 [shape = 'u32[]', space=smem, size = 0x4, offset = 0x4, fixed_abs, tag = 'smem constant byte address 0x4 - core index']
  #allocation1 [shape = 'u32[144,128]{1,0:T(1,128)}', space=vmem, size = 0x12000, scoped, tag = 'internal scratch']
  %s0 = inlined_call_operand.vmem [shape: bf16[512,392], index: 0, kind: input, shape index: {}]
  %s1 = inlined_call_operand.vmem [shape: bf16[392,128], index: 1, kind: input, shape index: {}]
  %s2 = inlined_call_operand.vmem [shape: f32[1,128], index: 2, kind: input, shape index: {}]
  %s3 = inlined_call_operand.hbm [shape: bf16[512,128], index: 3, kind: output, shape index: {}]
  %s4 = sld [smem:[#allocation0]]
  $region45: #{tpu_custom_call.1} parent=0
    _
  %s6 = ssub.s32 1, %s4
  %s7 = scalar_select 0, %s6, %s4
  $region1: #{tpu_custom_call.1} parent=0
    #allocation2 [shape = 'u8[131072]{0}', space=vmem, size = 0x20000, scoped, tag = 'output window, operand 0']
    #allocation3 [shape = 's32[2]{0}', space=sflag, size = 0x8, scoped, tag = 'scoped memory for tpu_custom_call.1']
    %8 = vsyncpa [#allocation3], 0
    %s9 = scalar_lea.sflag [#allocation3], 1
    %10 = vsyncpa %s9, 0
    loop: start=0, step=1, limit=4
    $region2: #{tpu_custom_call.1} parent=1 // loop_pre_header
      _
    $region3: #{tpu_custom_call.1} parent=1 // loop_header
      %s12 = sphi 0, %s16
      %p13 = scmp.ge.s32.totalorder %s12, 4
      %s19 = sphi 0, %s31
      %s20 = sphi 0, %s27
      %s21 = sphi 0, %s19
      %s22 = sphi 0, %s20
      %s23 = sphi 0, %s21
      %s24 = sphi 0, %s22
      %s34 = sphi 0, %s36
      %s37 = sphi 0, %s34
      %s38 = sphi 0, %s37
      %s54 = sphi 0, %s38
      %s60 = sphi 0, %s62
      %s63 = sphi 0, %s60
      %s64 = sphi 0, %s63
      %s80 = sphi 0, %s64
      %s86 = sphi 0, %s88
      %s89 = sphi 0, %s86
      %s90 = sphi 0, %s89
      %s106 = sphi 0, %s90
      %s114 = sphi 0, %s116
      %s117 = sphi 0, %s114
      %s118 = sphi 0, %s117
      %s134 = sphi 0, %s118
    $region4: #{tpu_custom_call.1} parent=1 // loop_header_branch
      %15 = sbr.rel (%p13) target = $region8
    $region5: #{tpu_custom_call.1} parent=1 // loop_body
      %s17 = ssub.s32 %s12, 1
      %s18 = ssub.s32 %s12, 2
      %s25 = sadd.s32 1, %s20
      %p26 = scmp.ge.s32.totalorder %s25, 1
      %s27 = scalar_select %p26, 0, %s25
      %s28 = sadd.s32 1, %s19
      %s29 = scalar_select %p26, %s28, %s19
      %p30 = scmp.ge.s32.totalorder %s29, 2
      %s31 = scalar_select %p30, 0, %s29
      %s32 = ssub.s32 %s19, %s31
      %p33 = scmp.eq.s32.totalorder %s32, 0
      %s35 = sadd.s32 %s34, 1
      %s36 = scalar_select %p33, %s34, %s35
      %p39 = pneg %p33
      %p40 = scmp.eq.s32.totalorder %s12, 1
      %p41 = por %p39, %p40
      %p42 = scmp.ne.s32.totalorder %s34, %s37
      %p43 = scmp.eq.s32.totalorder %s12, 0
      %p44 = por %p42, %p43
      %p45 = scmp.ne.s32.totalorder %s34, %s37
      %p46 = scmp.eq.s32.totalorder %s17, 1
      %p47 = por %p45, %p46
      %p48 = scmp.ne.s32.totalorder %s37, %s38
      %p49 = scmp.eq.s32.totalorder %s17, 0
      %p50 = por %p48, %p49
      %p51 = scmp.ne.s32.totalorder %s37, %s38
      %p52 = scmp.eq.s32.totalorder %s18, 1
      %p53 = por %p51, %p52
      %p55 = scmp.ne.s32.totalorder %s38, %s54
      %p56 = scmp.eq.s32.totalorder %s18, 0
      %p57 = por %p55, %p56
      %s58 = ssub.s32 %s20, %s27
      %p59 = scmp.eq.s32.totalorder %s58, 0
      %s61 = sadd.s32 %s60, 1
      %s62 = scalar_select %p59, %s60, %s61
      %p65 = pneg %p59
      %p66 = scmp.eq.s32.totalorder %s12, 1
      %p67 = por %p65, %p66
      %p68 = scmp.ne.s32.totalorder %s60, %s63
      %p69 = scmp.eq.s32.totalorder %s12, 0
      %p70 = por %p68, %p69
      %p71 = scmp.ne.s32.totalorder %s60, %s63
      %p72 = scmp.eq.s32.totalorder %s17, 1
      %p73 = por %p71, %p72
      %p74 = scmp.ne.s32.totalorder %s63, %s64
      %p75 = scmp.eq.s32.totalorder %s17, 0
      %p76 = por %p74, %p75
      %p77 = scmp.ne.s32.totalorder %s63, %s64
      %p78 = scmp.eq.s32.totalorder %s18, 1
      %p79 = por %p77, %p78
      %p81 = scmp.ne.s32.totalorder %s64, %s80
      %p82 = scmp.eq.s32.totalorder %s18, 0
      %p83 = por %p81, %p82
      %s84 = ssub.s32 %s20, %s27
      %p85 = scmp.eq.s32.totalorder %s84, 0
      %s87 = sadd.s32 %s86, 1
      %s88 = scalar_select %p85, %s86, %s87
      %p91 = pneg %p85
      %p92 = scmp.eq.s32.totalorder %s12, 1
      %p93 = por %p91, %p92
      %p94 = scmp.ne.s32.totalorder %s86, %s89
      %p95 = scmp.eq.s32.totalorder %s12, 0
      %p96 = por %p94, %p95
      %p97 = scmp.ne.s32.totalorder %s86, %s89
      %p98 = scmp.eq.s32.totalorder %s17, 1
      %p99 = por %p97, %p98
      %p100 = scmp.ne.s32.totalorder %s89, %s90
      %p101 = scmp.eq.s32.totalorder %s17, 0
      %p102 = por %p100, %p101
      %p103 = scmp.ne.s32.totalorder %s89, %s90
      %p104 = scmp.eq.s32.totalorder %s18, 1
      %p105 = por %p103, %p104
      %p107 = scmp.ne.s32.totalorder %s90, %s106
      %p108 = scmp.eq.s32.totalorder %s18, 0
      %p109 = por %p107, %p108
      %s110 = ssub.s32 %s19, %s31
      %s111 = ssub.s32 %s20, %s27
      %s112 = sor.u32 %s110, %s111
      %p113 = scmp.eq.s32.totalorder %s112, 0
      %s115 = sadd.s32 %s114, 1
      %s116 = scalar_select %p113, %s114, %s115
      %p119 = pneg %p113
      %p120 = scmp.eq.s32.totalorder %s12, 1
      %p121 = por %p119, %p120
      %p122 = scmp.ne.s32.totalorder %s114, %s117
      %p123 = scmp.eq.s32.totalorder %s12, 0
      %p124 = por %p122, %p123
      %p125 = scmp.ne.s32.totalorder %s114, %s117
      %p126 = scmp.eq.s32.totalorder %s17, 1
      %p127 = por %p125, %p126
      %p128 = scmp.ne.s32.totalorder %s117, %s118
      %p129 = scmp.eq.s32.totalorder %s17, 0
      %p130 = por %p128, %p129
      %p131 = scmp.ne.s32.totalorder %s117, %s118
      %p132 = scmp.eq.s32.totalorder %s18, 1
      %p133 = por %p131, %p132
      %p135 = scmp.ne.s32.totalorder %s118, %s134
      %p136 = scmp.eq.s32.totalorder %s18, 0
      %p137 = por %p135, %p136
      %p138 = scmp.le.s32.totalorder 1, %s12
      %p139 = scmp.lt.s32.totalorder %s12, 3
      %p140 = pnand %p138, %p139
      %p141 = pneg %p140
      // Predicated region
      $region9: #{tpu_custom_call.1} parent=5 // pred_check
        _
      $region10: #{tpu_custom_call.1} parent=5 // pred_check_branch
        %143 = sbr.rel (%p140) target = $region12
      $region11: #{tpu_custom_call.1} parent=5 // pred_region
        %s144 = ssub.s32 %s12, 1
        // Predicated region
        $region13: #{tpu_custom_call.1} parent=11 // pred_check
          %p145 = pneg %p76
        $region14: #{tpu_custom_call.1} parent=11 // pred_check_branch
          %147 = sbr.rel (%p145) target = $region16
        $region15: #{tpu_custom_call.1} parent=11 // pred_region
          %p148 = scmp.lt.s32.totalorder %s22, 0
          %s149 = scalar_select %p148, %s22, 0
          %s150 = smul.addr %s149, 4
          %s151 = scalar_lea.vmem %s1, %s150
        $region16: #{tpu_custom_call.1} parent=11 // pred_fallthru
          _
        // Predicated region
        $region17: #{tpu_custom_call.1} parent=11 // pred_check
          %p152 = pneg %p102
        $region18: #{tpu_custom_call.1} parent=11 // pred_check_branch
          %154 = sbr.rel (%p152) target = $region20
        $region19: #{tpu_custom_call.1} parent=11 // pred_region
          %p155 = scmp.lt.s32.totalorder %s22, 0
          %s156 = scalar_select %p155, %s22, 0
          %s157 = scalar_lea.vmem %s2, %s156
        $region20: #{tpu_custom_call.1} parent=11 // pred_fallthru
          _
      $region12: #{tpu_custom_call.1} parent=5 // pred_fallthru
        _
      %p158 = scmp.lt.s32.totalorder %s12, 2
      // Predicated region
      $region21: #{tpu_custom_call.1} parent=5 // pred_check
        %p159 = pneg %p158
      $region22: #{tpu_custom_call.1} parent=5 // pred_check_branch
        %161 = sbr.rel (%p159) target = $region24
      $region23: #{tpu_custom_call.1} parent=5 // pred_region
        // Predicated region
        $region25: #{tpu_custom_call.1} parent=23 // pred_check
          %p162 = pneg %p44
        $region26: #{tpu_custom_call.1} parent=23 // pred_check_branch
          %164 = sbr.rel (%p162) target = $region28
        $region27: #{tpu_custom_call.1} parent=23 // pred_region
          %s165 = smul.u32 32, %s19
          %p166 = scmp.lt.s32.totalorder %s165, 63
          %s167 = scalar_select %p166, %s165, 63
          %s168 = smul.addr %s167, 4
          %s169 = smul.addr %s168, 4
          %s170 = scalar_lea.vmem %s0, %s169
          %s171 = smul.u32 32, %s19
        $region28: #{tpu_custom_call.1} parent=23 // pred_fallthru
          _
      $region24: #{tpu_custom_call.1} parent=5 // pred_fallthru
        _
      %p172 = scmp.le.s32.totalorder 1, %s12
      %p173 = scmp.lt.s32.totalorder %s12, 3
      %p174 = pnand %p172, %p173
      %p175 = pneg %p174
      // Predicated region
      $region29: #{tpu_custom_call.1} parent=5 // pred_check
        _
      $region30: #{tpu_custom_call.1} parent=5 // pred_check_branch
        %177 = sbr.rel (%p174) target = $region32
      $region31: #{tpu_custom_call.1} parent=5 // pred_region
        %s178 = ssub.s32 %s12, 1
        %s179 = smul.u32 32, %s21
        %p180 = scmp.lt.s32.totalorder %s179, 63
        %s181 = scalar_select %p180, %s179, 63
        %s182 = smul.addr %s181, 4
        %s183 = smul.addr %s182, 4
        %s184 = scalar_lea.vmem %s0, %s183
        %p185 = pneg %p50
        %p186 = pneg %p47
        %p187 = scmp.lt.s32.totalorder %s22, 0
        %s188 = scalar_select %p187, %s22, 0
        %s189 = smul.addr %s188, 4
        %s190 = scalar_lea.vmem %s1, %s189
        %p191 = pneg %p76
        %p192 = pneg %p73
        %p193 = scmp.lt.s32.totalorder %s22, 0
        %s194 = scalar_select %p193, %s22, 0
        %s195 = scalar_lea.vmem %s2, %s194
        %p196 = pneg %p102
        %p197 = pneg %p99
        %p198 = pneg %p130
        %p199 = pneg %p127
        %s200 = sand.u32 %s117, 1
        %s201 = scalar_lea.sflag [#allocation3], %s200
        %s202 = sand.u32 %s117, 1
        %s203 = smul.addr %s202, 128
        %s204 = scalar_lea.vmem [#allocation2], %s203
        %s205 = smul.u32 32, %s21
        %p206 = scmp.lt.s32.totalorder %s205, 63
        %s207 = scalar_select %p206, %s205, 63
        %s208 = smul.addr %s207, 4
        %s209 = smul.addr %s208, 4
        %s210 = scalar_lea.vmem %s0, %s209
        %s211 = smul.u32 32, %s21
        %p212 = scmp.lt.s32.totalorder %s22, 0
        %s213 = scalar_select %p212, %s22, 0
        %s214 = smul.addr %s213, 4
        %s215 = scalar_lea.vmem %s1, %s214
        %p216 = scmp.lt.s32.totalorder %s22, 0
        %s217 = scalar_select %p216, %s22, 0
        %s218 = scalar_lea.vmem %s2, %s217
        %s219 = smul.u32 32, %s21
        %v221 = vld [vmem:[%s210] sm:$0xff]
        %v222 = vld [vmem:[%s210 + $0x8] sm:$0xff]
        %v223 = vld [vmem:[%s210 + $0x10] sm:$0xff]
        %v224 = vld [vmem:[%s210 + $0x18] sm:$0xff]
        %v225 = vld [vmem:[%s210 + $0x20] sm:$0xff]
        %v226 = vld [vmem:[%s210 + $0x28] sm:$0xff]
        %v227 = vld [vmem:[%s210 + $0x30] sm:$0xff]
        %v228 = vld [vmem:[%s210 + $0x38] sm:$0xff]
        %v229 = vld [vmem:[%s210 + $0x40] sm:$0xff]
        %v230 = vld [vmem:[%s210 + $0x48] sm:$0xff]
        %v231 = vld [vmem:[%s210 + $0x50] sm:$0xff]
        %v232 = vld [vmem:[%s210 + $0x58] sm:$0xff]
        %v233 = vld [vmem:[%s210 + $0x60] sm:$0xff]
        %v234 = vld [vmem:[%s210 + $0x68] sm:$0xff]
        %v235 = vld [vmem:[%s210 + $0x70] sm:$0xff]
        %v236 = vld [vmem:[%s210 + $0x78] sm:$0xff]
        %v237 = vld [vmem:[%s210 + $0x80] sm:$0xff]
        %v238 = vld [vmem:[%s210 + $0x88] sm:$0xff]
        %v239 = vld [vmem:[%s210 + $0x90] sm:$0xff]
        %v240 = vld [vmem:[%s210 + $0x98] sm:$0xff]
        %v241 = vld [vmem:[%s210 + $0xa0] sm:$0xff]
        %v242 = vld [vmem:[%s210 + $0xa8] sm:$0xff]
        %v243 = vld [vmem:[%s210 + $0xb0] sm:$0xff]
        %v244 = vld [vmem:[%s210 + $0xb8] sm:$0xff]
        %v245 = vld [vmem:[%s210 + $0xc0] sm:$0xff]
        %v246 = vld [vmem:[%s210 + $0xc8] sm:$0xff]
        %v247 = vld [vmem:[%s210 + $0xd0] sm:$0xff]
        %v248 = vld [vmem:[%s210 + $0xd8] sm:$0xff]
        %v249 = vld [vmem:[%s210 + $0xe0] sm:$0xff]
        %v250 = vld [vmem:[%s210 + $0xe8] sm:$0xff]
        %v251 = vld [vmem:[%s210 + $0xf0] sm:$0xff]
        %v252 = vld [vmem:[%s210 + $0xf8] sm:$0xff]
        %v253 = vld [vmem:[%s210 + $0x100] sm:$0xff]
        %v254 = vld [vmem:[%s210 + $0x108] sm:$0xff]
        %v255 = vld [vmem:[%s210 + $0x110] sm:$0xff]
        %v256 = vld [vmem:[%s210 + $0x118] sm:$0xff]
        %v257 = vld [vmem:[%s210 + $0x120] sm:$0xff]
        %v258 = vld [vmem:[%s210 + $0x128] sm:$0xff]
        %v259 = vld [vmem:[%s210 + $0x130] sm:$0xff]
        %v260 = vld [vmem:[%s210 + $0x138] sm:$0xff]
        %v261 = vld [vmem:[%s210 + $0x140] sm:$0xff]
        %v262 = vld [vmem:[%s210 + $0x148] sm:$0xff]
        %v263 = vld [vmem:[%s210 + $0x150] sm:$0xff]
        %v264 = vld [vmem:[%s210 + $0x158] sm:$0xff]
        %v265 = vld [vmem:[%s210 + $0x160] sm:$0xff]
        %v266 = vld [vmem:[%s210 + $0x168] sm:$0xff]
        %v267 = vld [vmem:[%s210 + $0x170] sm:$0xff]
        %v268 = vld [vmem:[%s210 + $0x178] sm:$0xff]
        %v269 = vld [vmem:[%s210 + $0x180] sm:$0xff]
        %v270 = vld [vmem:[%s210 + $0x188] sm:$0xff]
        %v271 = vld [vmem:[%s210 + $0x190] sm:$0xff]
        %v272 = vld [vmem:[%s210 + $0x198] sm:$0xff]
        %v273 = vld [vmem:[%s210 + $0x1a0] sm:$0xff]
        %v274 = vld [vmem:[%s210 + $0x1a8] sm:$0xff]
        %v275 = vld [vmem:[%s210 + $0x1b0] sm:$0xff]
        %v276 = vld [vmem:[%s210 + $0x1b8] sm:$0xff]
        %v277 = vld [vmem:[%s210 + $0x1c0] sm:$0xff]
        %v278 = vld [vmem:[%s210 + $0x1c8] sm:$0xff]
        %v279 = vld [vmem:[%s210 + $0x1d0] sm:$0xff]
        %v280 = vld [vmem:[%s210 + $0x1d8] sm:$0xff]
        %v281 = vld [vmem:[%s210 + $0x1e0] sm:$0xff]
        %v282 = vld [vmem:[%s210 + $0x1e8] sm:$0xff]
        %v283 = vld [vmem:[%s210 + $0x1f0] sm:$0xff]
        %v284 = vld [vmem:[%s210 + $0x1f8] sm:$0xff]
        %v285 = vld [vmem:[%s215] sm:$0xf]
        %v286 = vld [vmem:[%s215 + $0x4] sm:$0xf]
        %v287 = vld [vmem:[%s215 + $0x8] sm:$0xf]
        %v288 = vld [vmem:[%s215 + $0xc] sm:$0xf]
        %v289 = vld [vmem:[%s215 + $0x10] sm:$0xf]
        %v290 = vld [vmem:[%s215 + $0x14] sm:$0xf]
        %v291 = vld [vmem:[%s215 + $0x18] sm:$0xf]
        %v292 = vld [vmem:[%s215 + $0x1c] sm:$0xf]
        %v293 = vld [vmem:[%s215 + $0x20] sm:$0xf]
        %v294 = vld [vmem:[%s215 + $0x24] sm:$0xf]
        %v295 = vld [vmem:[%s215 + $0x28] sm:$0xf]
        %v296 = vld [vmem:[%s215 + $0x2c] sm:$0xf]
        %v297 = vld [vmem:[%s215 + $0x30] sm:$0xf]
        %v298 = vld [vmem:[%s215 + $0x34] sm:$0xf]
        %v299 = vld [vmem:[%s215 + $0x38] sm:$0xf]
        %v300 = vld [vmem:[%s215 + $0x3c] sm:$0xf]
        %v301 = vld [vmem:[%s215 + $0x40] sm:$0xf]
        %v302 = vld [vmem:[%s215 + $0x44] sm:$0xf]
        %v303 = vld [vmem:[%s215 + $0x48] sm:$0xf]
        %v304 = vld [vmem:[%s215 + $0x4c] sm:$0xf]
        %v305 = vld [vmem:[%s215 + $0x50] sm:$0xf]
        %v306 = vld [vmem:[%s215 + $0x54] sm:$0xf]
        %v307 = vld [vmem:[%s215 + $0x58] sm:$0xf]
        %v308 = vld [vmem:[%s215 + $0x5c] sm:$0xf]
        %v309 = vld [vmem:[%s215 + $0x60] sm:$0xf]
        %v310 = vld [vmem:[%s215 + $0x64] sm:$0xf]
        %v311 = vld [vmem:[%s215 + $0x68] sm:$0xf]
        %v312 = vld [vmem:[%s215 + $0x6c] sm:$0xf]
        %v313 = vld [vmem:[%s215 + $0x70] sm:$0xf]
        %v314 = vld [vmem:[%s215 + $0x74] sm:$0xf]
        %v315 = vld [vmem:[%s215 + $0x78] sm:$0xf]
        %v316 = vld [vmem:[%s215 + $0x7c] sm:$0xf]
        %v317 = vld [vmem:[%s215 + $0x80] sm:$0xf]
        %v318 = vld [vmem:[%s215 + $0x84] sm:$0xf]
        %v319 = vld [vmem:[%s215 + $0x88] sm:$0xf]
        %v320 = vld [vmem:[%s215 + $0x8c] sm:$0xf]
        %v321 = vld [vmem:[%s215 + $0x90] sm:$0xf]
        %v322 = vld [vmem:[%s215 + $0x94] sm:$0xf]
        %v323 = vld [vmem:[%s215 + $0x98] sm:$0xf]
        %v324 = vld [vmem:[%s215 + $0x9c] sm:$0xf]
        %v325 = vld [vmem:[%s215 + $0xa0] sm:$0xf]
        %v326 = vld [vmem:[%s215 + $0xa4] sm:$0xf]
        %v327 = vld [vmem:[%s215 + $0xa8] sm:$0xf]
        %v328 = vld [vmem:[%s215 + $0xac] sm:$0xf]
        %v329 = vld [vmem:[%s215 + $0xb0] sm:$0xf]
        %v330 = vld [vmem:[%s215 + $0xb4] sm:$0xf]
        %v331 = vld [vmem:[%s215 + $0xb8] sm:$0xf]
        %v332 = vld [vmem:[%s215 + $0xbc] sm:$0xf]
        %v333 = vld [vmem:[%s215 + $0xc0] sm:$0xf]
        %v334 = vld [vmem:[%s218] sm:$0x1]
        %v336 = vlaneseq
        %v337 = vshrl.u32 %v336, 7
        %v338 = vsub.s32 0, %v337
        %v339 = vrot.slane %v334, %v338
        %v405 = vunpack.c.l.b16 %v221
        %v406 = vunpack.c.h.b16 %v221
        %v407 = vunpack.c.l.b16 %v222
        %v408 = vunpack.c.h.b16 %v222
        %v409 = vunpack.c.l.b16 %v223
        %v410 = vunpack.c.h.b16 %v223
        %v411 = vunpack.c.l.b16 %v224
        %v412 = vunpack.c.h.b16 %v224
        %v413 = vunpack.c.l.b16 %v225
        %v414 = vunpack.c.h.b16 %v225
        %v415 = vunpack.c.l.b16 %v226
        %v416 = vunpack.c.h.b16 %v226
        %v417 = vunpack.c.l.b16 %v227
        %v418 = vunpack.c.h.b16 %v227
        %v419 = vunpack.c.l.b16 %v228
        %v420 = vunpack.c.h.b16 %v228
        %v421 = vunpack.c.l.b16 %v229
        %v422 = vunpack.c.h.b16 %v229
        %v423 = vunpack.c.l.b16 %v230
        %v424 = vunpack.c.h.b16 %v230
        %v425 = vunpack.c.l.b16 %v231
        %v426 = vunpack.c.h.b16 %v231
        %v427 = vunpack.c.l.b16 %v232
        %v428 = vunpack.c.h.b16 %v232
        %v429 = vunpack.c.l.b16 %v233
        %v430 = vunpack.c.h.b16 %v233
        %v431 = vunpack.c.l.b16 %v234
        %v432 = vunpack.c.h.b16 %v234
        %v433 = vunpack.c.l.b16 %v235
        %v434 = vunpack.c.h.b16 %v235
        %v435 = vunpack.c.l.b16 %v236
        %v436 = vunpack.c.h.b16 %v236
        %v437 = vunpack.c.l.b16 %v237
        %v438 = vunpack.c.h.b16 %v237
        %v439 = vunpack.c.l.b16 %v238
        %v440 = vunpack.c.h.b16 %v238
        %v441 = vunpack.c.l.b16 %v239
        %v442 = vunpack.c.h.b16 %v239
        %v443 = vunpack.c.l.b16 %v240
        %v444 = vunpack.c.h.b16 %v240
        %v445 = vunpack.c.l.b16 %v241
        %v446 = vunpack.c.h.b16 %v241
        %v447 = vunpack.c.l.b16 %v242
        %v448 = vunpack.c.h.b16 %v242
        %v449 = vunpack.c.l.b16 %v243
        %v450 = vunpack.c.h.b16 %v243
        %v451 = vunpack.c.l.b16 %v244
        %v452 = vunpack.c.h.b16 %v244
        %v453 = vunpack.c.l.b16 %v245
        %v454 = vunpack.c.h.b16 %v245
        %v455 = vunpack.c.l.b16 %v246
        %v456 = vunpack.c.h.b16 %v246
        %v457 = vunpack.c.l.b16 %v247
        %v458 = vunpack.c.h.b16 %v247
        %v459 = vunpack.c.l.b16 %v248
        %v460 = vunpack.c.h.b16 %v248
        %v461 = vunpack.c.l.b16 %v249
        %v462 = vunpack.c.h.b16 %v249
        %v463 = vunpack.c.l.b16 %v250
        %v464 = vunpack.c.h.b16 %v250
        %v465 = vunpack.c.l.b16 %v251
        %v466 = vunpack.c.h.b16 %v251
        %v467 = vunpack.c.l.b16 %v252
        %v468 = vunpack.c.h.b16 %v252
        %v469 = vunpack.c.l.b16 %v253
        %v470 = vunpack.c.h.b16 %v253
        %v471 = vunpack.c.l.b16 %v254
        %v472 = vunpack.c.h.b16 %v254
        %v473 = vunpack.c.l.b16 %v255
        %v474 = vunpack.c.h.b16 %v255
        %v475 = vunpack.c.l.b16 %v256
        %v476 = vunpack.c.h.b16 %v256
        %v477 = vunpack.c.l.b16 %v257
        %v478 = vunpack.c.h.b16 %v257
        %v479 = vunpack.c.l.b16 %v258
        %v480 = vunpack.c.h.b16 %v258
        %v481 = vunpack.c.l.b16 %v259
        %v482 = vunpack.c.h.b16 %v259
        %v483 = vunpack.c.l.b16 %v260
        %v484 = vunpack.c.h.b16 %v260
        %v485 = vunpack.c.l.b16 %v261
        %v486 = vunpack.c.h.b16 %v261
        %v487 = vunpack.c.l.b16 %v262
        %v488 = vunpack.c.h.b16 %v262
        %v489 = vunpack.c.l.b16 %v263
        %v490 = vunpack.c.h.b16 %v263
        %v491 = vunpack.c.l.b16 %v264
        %v492 = vunpack.c.h.b16 %v264
        %v493 = vunpack.c.l.b16 %v265
        %v494 = vunpack.c.h.b16 %v265
        %v495 = vunpack.c.l.b16 %v266
        %v496 = vunpack.c.h.b16 %v266
        %v497 = vunpack.c.l.b16 %v267
        %v498 = vunpack.c.h.b16 %v267
        %v499 = vunpack.c.l.b16 %v268
        %v500 = vunpack.c.h.b16 %v268
        %v501 = vunpack.c.l.b16 %v269
        %v502 = vunpack.c.h.b16 %v269
        %v503 = vunpack.c.l.b16 %v270
        %v504 = vunpack.c.h.b16 %v270
        %v505 = vunpack.c.l.b16 %v271
        %v506 = vunpack.c.h.b16 %v271
        %v507 = vunpack.c.l.b16 %v272
        %v508 = vunpack.c.h.b16 %v272
        %v509 = vunpack.c.l.b16 %v273
        %v510 = vunpack.c.h.b16 %v273
        %v511 = vunpack.c.l.b16 %v274
        %v512 = vunpack.c.h.b16 %v274
        %v513 = vunpack.c.l.b16 %v275
        %v514 = vunpack.c.h.b16 %v275
        %v515 = vunpack.c.l.b16 %v276
        %v516 = vunpack.c.h.b16 %v276
        %v517 = vunpack.c.l.b16 %v277
        %v518 = vunpack.c.h.b16 %v277
        %v519 = vunpack.c.l.b16 %v278
        %v520 = vunpack.c.h.b16 %v278
        %v521 = vunpack.c.l.b16 %v279
        %v522 = vunpack.c.h.b16 %v279
        %v523 = vunpack.c.l.b16 %v280
        %v524 = vunpack.c.h.b16 %v280
        %v525 = vunpack.c.l.b16 %v281
        %v526 = vunpack.c.h.b16 %v281
        %v527 = vunpack.c.l.b16 %v282
        %v528 = vunpack.c.h.b16 %v282
        %v529 = vunpack.c.l.b16 %v283
        %v530 = vunpack.c.h.b16 %v283
        %v531 = vunpack.c.l.b16 %v284
        %v532 = vunpack.c.h.b16 %v284
        %v533 = vpack.c.b16 %v409, %v405
        %v534 = vpack.c.b16 %v410, %v406
        %v535 = vpack.c.b16 %v411, %v407
        %v536 = vpack.c.b16 %v412, %v408
        %v537 = vpack.c.b16 %v417, %v413
        %v538 = vpack.c.b16 %v418, %v414
        %v539 = vpack.c.b16 %v419, %v415
        %v540 = vpack.c.b16 %v420, %v416
        %v541 = vpack.c.b16 %v425, %v421
        %v542 = vpack.c.b16 %v426, %v422
        %v543 = vpack.c.b16 %v427, %v423
        %v544 = vpack.c.b16 %v428, %v424
        %v545 = vpack.c.b16 %v433, %v429
        %v546 = vpack.c.b16 %v434, %v430
        %v547 = vpack.c.b16 %v435, %v431
        %v548 = vpack.c.b16 %v436, %v432
        %v549 = vpack.c.b16 %v441, %v437
        %v550 = vpack.c.b16 %v442, %v438
        %v551 = vpack.c.b16 %v443, %v439
        %v552 = vpack.c.b16 %v444, %v440
        %v553 = vpack.c.b16 %v449, %v445
        %v554 = vpack.c.b16 %v450, %v446
        %v555 = vpack.c.b16 %v451, %v447
        %v556 = vpack.c.b16 %v452, %v448
        %v557 = vpack.c.b16 %v457, %v453
        %v558 = vpack.c.b16 %v458, %v454
        %v559 = vpack.c.b16 %v459, %v455
        %v560 = vpack.c.b16 %v460, %v456
        %v561 = vpack.c.b16 %v465, %v461
        %v562 = vpack.c.b16 %v466, %v462
        %v563 = vpack.c.b16 %v467, %v463
        %v564 = vpack.c.b16 %v468, %v464
        %v565 = vpack.c.b16 %v473, %v469
        %v566 = vpack.c.b16 %v474, %v470
        %v567 = vpack.c.b16 %v475, %v471
        %v568 = vpack.c.b16 %v476, %v472
        %v569 = vpack.c.b16 %v481, %v477
        %v570 = vpack.c.b16 %v482, %v478
        %v571 = vpack.c.b16 %v483, %v479
        %v572 = vpack.c.b16 %v484, %v480
        %v573 = vpack.c.b16 %v489, %v485
        %v574 = vpack.c.b16 %v490, %v486
        %v575 = vpack.c.b16 %v491, %v487
        %v576 = vpack.c.b16 %v492, %v488
        %v577 = vpack.c.b16 %v497, %v493
        %v578 = vpack.c.b16 %v498, %v494
        %v579 = vpack.c.b16 %v499, %v495
        %v580 = vpack.c.b16 %v500, %v496
        %v581 = vpack.c.b16 %v505, %v501
        %v582 = vpack.c.b16 %v506, %v502
        %v583 = vpack.c.b16 %v507, %v503
        %v584 = vpack.c.b16 %v508, %v504
        %v585 = vpack.c.b16 %v513, %v509
        %v586 = vpack.c.b16 %v514, %v510
        %v587 = vpack.c.b16 %v515, %v511
        %v588 = vpack.c.b16 %v516, %v512
        %v589 = vpack.c.b16 %v521, %v517
        %v590 = vpack.c.b16 %v522, %v518
        %v591 = vpack.c.b16 %v523, %v519
        %v592 = vpack.c.b16 %v524, %v520
        %v593 = vpack.c.b16 %v529, %v525
        %v594 = vpack.c.b16 %v530, %v526
        %v595 = vpack.c.b16 %v531, %v527
        %v596 = vpack.c.b16 %v532, %v528
        %v694 = vunpack.c.l.b16 %v285
        %v695 = vunpack.c.l.b16 %v286
        %v696 = vunpack.c.l.b16 %v287
        %v697 = vunpack.c.l.b16 %v288
        %v698 = vunpack.c.l.b16 %v289
        %v699 = vunpack.c.l.b16 %v290
        %v700 = vunpack.c.l.b16 %v291
        %v701 = vunpack.c.l.b16 %v292
        %v702 = vunpack.c.l.b16 %v293
        %v703 = vunpack.c.l.b16 %v294
        %v704 = vunpack.c.l.b16 %v295
        %v705 = vunpack.c.l.b16 %v296
        %v706 = vunpack.c.l.b16 %v297
        %v707 = vunpack.c.l.b16 %v298
        %v708 = vunpack.c.l.b16 %v299
        %v709 = vunpack.c.l.b16 %v300
        %v710 = vunpack.c.l.b16 %v301
        %v711 = vunpack.c.l.b16 %v302
        %v712 = vunpack.c.l.b16 %v303
        %v713 = vunpack.c.l.b16 %v304
        %v714 = vunpack.c.l.b16 %v305
        %v715 = vunpack.c.l.b16 %v306
        %v716 = vunpack.c.l.b16 %v307
        %v717 = vunpack.c.l.b16 %v308
        %v718 = vunpack.c.l.b16 %v309
        %v719 = vunpack.c.l.b16 %v310
        %v720 = vunpack.c.l.b16 %v311
        %v721 = vunpack.c.l.b16 %v312
        %v722 = vunpack.c.l.b16 %v313
        %v723 = vunpack.c.l.b16 %v314
        %v724 = vunpack.c.l.b16 %v315
        %v725 = vunpack.c.l.b16 %v316
        %v726 = vunpack.c.l.b16 %v317
        %v727 = vunpack.c.l.b16 %v318
        %v728 = vunpack.c.l.b16 %v319
        %v729 = vunpack.c.l.b16 %v320
        %v730 = vunpack.c.l.b16 %v321
        %v731 = vunpack.c.l.b16 %v322
        %v732 = vunpack.c.l.b16 %v323
        %v733 = vunpack.c.l.b16 %v324
        %v734 = vunpack.c.l.b16 %v325
        %v735 = vunpack.c.l.b16 %v326
        %v736 = vunpack.c.l.b16 %v327
        %v737 = vunpack.c.l.b16 %v328
        %v738 = vunpack.c.l.b16 %v329
        %v739 = vunpack.c.l.b16 %v330
        %v740 = vunpack.c.l.b16 %v331
        %v741 = vunpack.c.l.b16 %v332
        %v742 = vunpack.c.l.b16 %v333
        %v743 = vpack.c.b16 %v695, %v694
        %v744 = vpack.c.b16 %v697, %v696
        %v745 = vpack.c.b16 %v699, %v698
        %v746 = vpack.c.b16 %v701, %v700
        %v747 = vpack.c.b16 %v703, %v702
        %v748 = vpack.c.b16 %v705, %v704
        %v749 = vpack.c.b16 %v707, %v706
        %v750 = vpack.c.b16 %v709, %v708
        %v751 = vpack.c.b16 %v711, %v710
        %v752 = vpack.c.b16 %v713, %v712
        %v753 = vpack.c.b16 %v715, %v714
        %v754 = vpack.c.b16 %v717, %v716
        %v755 = vpack.c.b16 %v719, %v718
        %v756 = vpack.c.b16 %v721, %v720
        %v757 = vpack.c.b16 %v723, %v722
        %v758 = vpack.c.b16 %v725, %v724
        %v759 = vpack.c.b16 %v727, %v726
        %v760 = vpack.c.b16 %v729, %v728
        %v761 = vpack.c.b16 %v731, %v730
        %v762 = vpack.c.b16 %v733, %v732
        %v763 = vpack.c.b16 %v735, %v734
        %v764 = vpack.c.b16 %v737, %v736
        %v765 = vpack.c.b16 %v739, %v738
        %v766 = vpack.c.b16 %v741, %v740
        %v767 = vpack.c.b16 %v742, %v742
        %vm792 = vcmask 64512
        %v794 = vsel %vm792, %v536, 0
        %v797 = vsel %vm792, %v540, 0
        %v800 = vsel %vm792, %v544, 0
        %v803 = vsel %vm792, %v548, 0
        %v806 = vsel %vm792, %v552, 0
        %v809 = vsel %vm792, %v556, 0
        %v812 = vsel %vm792, %v560, 0
        %v815 = vsel %vm792, %v564, 0
        %v818 = vsel %vm792, %v568, 0
        %v821 = vsel %vm792, %v572, 0
        %v824 = vsel %vm792, %v576, 0
        %v827 = vsel %vm792, %v580, 0
        %v830 = vsel %vm792, %v584, 0
        %v833 = vsel %vm792, %v588, 0
        %v836 = vsel %vm792, %v592, 0
        %v839 = vsel %vm792, %v596, 0
        %vm841 = vcmask 1043456
        %v843 = vsel %vm841, %v767, 0
        %845 = vmatprep.subr.bf16.mxu0 0
        %846 = vmatpush1.bf16.msra.mxu0 %v743
        %847 = vmatprep.subr.bf16.mxu0 0
        %848 = vmatpush1.bf16.msra.mxu0 %v744
        %849 = vmatprep.subr.bf16.mxu0 0
        %850 = vmatpush1.bf16.msra.mxu0 %v745
        %851 = vmatprep.subr.bf16.mxu0 0
        %852 = vmatpush1.bf16.msra.mxu0 %v746
        %853 = vmatprep.subr.bf16.mxu0 0
        %854 = vmatpush1.bf16.msra.mxu0 %v747
        %855 = vmatprep.subr.bf16.mxu0 0
        %856 = vmatpush1.bf16.msra.mxu0 %v748
        %857 = vmatprep.subr.bf16.mxu0 0
        %858 = vmatpush1.bf16.msra.mxu0 %v749
        %859 = vmatprep.subr.bf16.mxu0 0
        %860 = vmatpush1.bf16.msra.mxu0 %v750
        %861 = vmatprep.subr.bf16.mxu0 0
        %862 = vmatpush1.bf16.msra.mxu0 %v751
        %863 = vmatprep.subr.bf16.mxu0 0
        %864 = vmatpush1.bf16.msra.mxu0 %v752
        %865 = vmatprep.subr.bf16.mxu0 0
        %866 = vmatpush1.bf16.msra.mxu0 %v753
        %867 = vmatprep.subr.bf16.mxu0 0
        %868 = vmatpush1.bf16.msra.mxu0 %v754
        %869 = vmatprep.subr.bf16.mxu0 0
        %870 = vmatpush1.bf16.msra.mxu0 %v755
        %871 = vmatprep.subr.bf16.mxu0 0
        %872 = vmatpush1.bf16.msra.mxu0 %v756
        %873 = vmatprep.subr.bf16.mxu0 0
        %874 = vmatpush1.bf16.msra.mxu0 %v757
        %875 = vmatprep.subr.bf16.mxu0 0
        %876 = vmatpush1.bf16.msra.mxu0 %v758
        %877 = vmatprep.mubr.bf16.mxu0 %v534
        %878 = vmatmul.mubr.bf16.gmra.mrb[0].mxu0 %v533
        %v879 = vpop.f32.mrb[0].mxu0
        %v880 = vadd.f32 %v339, %v879
        %v881 = vpop.f32.mrb[0].mxu0
        %v882 = vpop.f32.mrb[0].mxu0
        %v883 = vadd.f32 %v339, %v882
        %v884 = vpop.f32.mrb[0].mxu0
        %885 = vmatprep.mubr.bf16.mxu0 %v538
        %886 = vmatmul.mubr.bf16.gmra.mrb[0].mxu0 %v537
        %v887 = vpop.f32.mrb[0].mxu0
        %v888 = vadd.f32 %v339, %v887
        %v889 = vpop.f32.mrb[0].mxu0
        %v890 = vpop.f32.mrb[0].mxu0
        %v891 = vadd.f32 %v339, %v890
        %v892 = vpop.f32.mrb[0].mxu0
        %893 = vmatprep.mubr.bf16.mxu0 %v542
        %894 = vmatmul.mubr.bf16.gmra.mrb[0].mxu0 %v541
        %v895 = vpop.f32.mrb[0].mxu0
        %v896 = vadd.f32 %v339, %v895
        %v897 = vpop.f32.mrb[0].mxu0
        %v898 = vpop.f32.mrb[0].mxu0
        %v899 = vadd.f32 %v339, %v898
        %v900 = vpop.f32.mrb[0].mxu0
        %901 = vmatprep.mubr.bf16.mxu0 %v546
        %902 = vmatmul.mubr.bf16.gmra.mrb[0].mxu0 %v545
        %v903 = vpop.f32.mrb[0].mxu0
        %v904 = vadd.f32 %v339, %v903
        %v905 = vpop.f32.mrb[0].mxu0
        %v906 = vpop.f32.mrb[0].mxu0
        %v907 = vadd.f32 %v339, %v906
        %v908 = vpop.f32.mrb[0].mxu0
        %909 = vmatprep.mubr.bf16.mxu0 %v550
        %910 = vmatmul.mubr.bf16.gmra.mrb[0].mxu0 %v549
        %v911 = vpop.f32.mrb[0].mxu0
        %v912 = vadd.f32 %v339, %v911
        %v913 = vpop.f32.mrb[0].mxu0
        %v914 = vpop.f32.mrb[0].mxu0
        %v915 = vadd.f32 %v339, %v914
        %v916 = vpop.f32.mrb[0].mxu0
        %917 = vmatprep.mubr.bf16.mxu0 %v554
        %918 = vmatmul.mubr.bf16.gmra.mrb[0].mxu0 %v553
        %v919 = vpop.f32.mrb[0].mxu0
        %v920 = vadd.f32 %v339, %v919
        %v921 = vpop.f32.mrb[0].mxu0
        %v922 = vpop.f32.mrb[0].mxu0
        %v923 = vadd.f32 %v339, %v922
        %v924 = vpop.f32.mrb[0].mxu0
        %925 = vmatprep.mubr.bf16.mxu0 %v558
        %926 = vmatmul.mubr.bf16.gmra.mrb[0].mxu0 %v557
        %v927 = vpop.f32.mrb[0].mxu0
        %v928 = vadd.f32 %v339, %v927
        %v929 = vpop.f32.mrb[0].mxu0
        %v930 = vpop.f32.mrb[0].mxu0
        %v931 = vadd.f32 %v339, %v930
        %v932 = vpop.f32.mrb[0].mxu0
        %933 = vmatprep.mubr.bf16.mxu0 %v562
        %934 = vmatmul.mubr.bf16.gmra.mrb[0].mxu0 %v561
        %v935 = vpop.f32.mrb[0].mxu0
        %v936 = vadd.f32 %v339, %v935
        %v937 = vpop.f32.mrb[0].mxu0
        %v938 = vpop.f32.mrb[0].mxu0
        %v939 = vadd.f32 %v339, %v938
        %v940 = vpop.f32.mrb[0].mxu0
        %941 = vmatprep.mubr.bf16.mxu0 %v566
        %942 = vmatmul.mubr.bf16.gmra.mrb[0].mxu0 %v565
        %v943 = vpop.f32.mrb[0].mxu0
        %v944 = vadd.f32 %v339, %v943
        %v945 = vpop.f32.mrb[0].mxu0
        %v946 = vpop.f32.mrb[0].mxu0
        %v947 = vadd.f32 %v339, %v946
        %v948 = vpop.f32.mrb[0].mxu0
        %949 = vmatprep.mubr.bf16.mxu0 %v570
        %950 = vmatmul.mubr.bf16.gmra.mrb[0].mxu0 %v569
        %v951 = vpop.f32.mrb[0].mxu0
        %v952 = vadd.f32 %v339, %v951
        %v953 = vpop.f32.mrb[0].mxu0
        %v954 = vpop.f32.mrb[0].mxu0
        %v955 = vadd.f32 %v339, %v954
        %v956 = vpop.f32.mrb[0].mxu0
        %957 = vmatprep.mubr.bf16.mxu0 %v574
        %958 = vmatmul.mubr.bf16.gmra.mrb[0].mxu0 %v573
        %v959 = vpop.f32.mrb[0].mxu0
        %v960 = vadd.f32 %v339, %v959
        %v961 = vpop.f32.mrb[0].mxu0
        %v962 = vpop.f32.mrb[0].mxu0
        %v963 = vadd.f32 %v339, %v962
        %v964 = vpop.f32.mrb[0].mxu0
        %965 = vmatprep.mubr.bf16.mxu0 %v578
        %966 = vmatmul.mubr.bf16.gmra.mrb[0].mxu0 %v577
        %v967 = vpop.f32.mrb[0].mxu0
        %v968 = vadd.f32 %v339, %v967
        %v969 = vpop.f32.mrb[0].mxu0
        %v970 = vpop.f32.mrb[0].mxu0
        %v971 = vadd.f32 %v339, %v970
        %v972 = vpop.f32.mrb[0].mxu0
        %973 = vmatprep.mubr.bf16.mxu0 %v582
        %974 = vmatmul.mubr.bf16.gmra.mrb[0].mxu0 %v581
        %v975 = vpop.f32.mrb[0].mxu0
        %v976 = vadd.f32 %v339, %v975
        %v977 = vpop.f32.mrb[0].mxu0
        %v978 = vpop.f32.mrb[0].mxu0
        %v979 = vadd.f32 %v339, %v978
        %v980 = vpop.f32.mrb[0].mxu0
        %981 = vmatprep.mubr.bf16.mxu0 %v586
        %982 = vmatmul.mubr.bf16.gmra.mrb[0].mxu0 %v585
        %v983 = vpop.f32.mrb[0].mxu0
        %v984 = vadd.f32 %v339, %v983
        %v985 = vpop.f32.mrb[0].mxu0
        %v986 = vpop.f32.mrb[0].mxu0
        %v987 = vadd.f32 %v339, %v986
        %v988 = vpop.f32.mrb[0].mxu0
        %989 = vmatprep.mubr.bf16.mxu0 %v590
        %990 = vmatmul.mubr.bf16.gmra.mrb[0].mxu0 %v589
        %v991 = vpop.f32.mrb[0].mxu0
        %v992 = vadd.f32 %v339, %v991
        %v993 = vpop.f32.mrb[0].mxu0
        %v994 = vpop.f32.mrb[0].mxu0
        %v995 = vadd.f32 %v339, %v994
        %v996 = vpop.f32.mrb[0].mxu0
        %997 = vmatprep.mubr.bf16.mxu0 %v594
        %998 = vmatmul.mubr.bf16.gmra.mrb[0].mxu0 %v593
        %v999 = vpop.f32.mrb[0].mxu0
        %v1000 = vadd.f32 %v339, %v999
        %v1001 = vpop.f32.mrb[0].mxu0
        %v1002 = vpop.f32.mrb[0].mxu0
        %v1003 = vadd.f32 %v339, %v1002
        %v1004 = vpop.f32.mrb[0].mxu0
        %1005 = vdwg.mxu0
        %1006 = vmatprep.subr.bf16.mxu0 0
        %1007 = vmatpush1.bf16.msra.mxu0 %v759
        %1008 = vmatprep.subr.bf16.mxu0 0
        %1009 = vmatpush1.bf16.msra.mxu0 %v760
        %1010 = vmatprep.subr.bf16.mxu0 0
        %1011 = vmatpush1.bf16.msra.mxu0 %v761
        %1012 = vmatprep.subr.bf16.mxu0 0
        %1013 = vmatpush1.bf16.msra.mxu0 %v762
        %1014 = vmatprep.subr.bf16.mxu0 0
        %1015 = vmatpush1.bf16.msra.mxu0 %v763
        %1016 = vmatprep.subr.bf16.mxu0 0
        %1017 = vmatpush1.bf16.msra.mxu0 %v764
        %1018 = vmatprep.subr.bf16.mxu0 0
        %1019 = vmatpush1.bf16.msra.mxu0 %v765
        %1020 = vmatprep.subr.bf16.mxu0 0
        %1021 = vmatpush1.bf16.msra.mxu0 %v766
        %1022 = vmatprep.subr.bf16.mxu0 0
        %1023 = vmatpush1.bf16.msra.mxu0 %v843
        %1024 = vmatprep.subr.bf16.mxu0 0
        %1025 = vmatpush1.bf16.msra.mxu0 0
        %1026 = vmatprep.subr.bf16.mxu0 0
        %1027 = vmatpush1.bf16.msra.mxu0 0
        %1028 = vmatprep.subr.bf16.mxu0 0
        %1029 = vmatpush1.bf16.msra.mxu0 0
        %1030 = vmatprep.subr.bf16.mxu0 0
        %1031 = vmatpush1.bf16.msra.mxu0 0
        %1032 = vmatprep.subr.bf16.mxu0 0
        %1033 = vmatpush1.bf16.msra.mxu0 0
        %1034 = vmatprep.subr.bf16.mxu0 0
        %1035 = vmatpush1.bf16.msra.mxu0 0
        %1036 = vmatprep.subr.bf16.mxu0 0
        %1037 = vmatpush1.bf16.msra.mxu0 0
        %1038 = vmatprep.mubr.bf16.mxu0 %v794
        %1039 = vmatmul.mubr.bf16.gmra.mrb[0].mxu0 %v535
        %v1040 = vpop.f32.mrb[0].mxu0
        %v1041 = vadd.f32 %v880, %v1040
        %v1042 = vpop.f32.mrb[0].mxu0
        %v1043 = vpop.f32.mrb[0].mxu0
        %v1044 = vadd.f32 %v883, %v1043
        %v1045 = vpop.f32.mrb[0].mxu0
        %1046 = vmatprep.mubr.bf16.mxu0 %v797
        %1047 = vmatmul.mubr.bf16.gmra.mrb[0].mxu0 %v539
        %v1048 = vpop.f32.mrb[0].mxu0
        %v1049 = vadd.f32 %v888, %v1048
        %v1050 = vpop.f32.mrb[0].mxu0
        %v1051 = vpop.f32.mrb[0].mxu0
        %v1052 = vadd.f32 %v891, %v1051
        %v1053 = vpop.f32.mrb[0].mxu0
        %1054 = vmatprep.mubr.bf16.mxu0 %v800
        %1055 = vmatmul.mubr.bf16.gmra.mrb[0].mxu0 %v543
        %v1056 = vpop.f32.mrb[0].mxu0
        %v1057 = vadd.f32 %v896, %v1056
        %v1058 = vpop.f32.mrb[0].mxu0
        %v1059 = vpop.f32.mrb[0].mxu0
        %v1060 = vadd.f32 %v899, %v1059
        %v1061 = vpop.f32.mrb[0].mxu0
        %1062 = vmatprep.mubr.bf16.mxu0 %v803
        %1063 = vmatmul.mubr.bf16.gmra.mrb[0].mxu0 %v547
        %v1064 = vpop.f32.mrb[0].mxu0
        %v1065 = vadd.f32 %v904, %v1064
        %v1066 = vpop.f32.mrb[0].mxu0
        %v1067 = vpop.f32.mrb[0].mxu0
        %v1068 = vadd.f32 %v907, %v1067
        %v1069 = vpop.f32.mrb[0].mxu0
        %1070 = vmatprep.mubr.bf16.mxu0 %v806
        %1071 = vmatmul.mubr.bf16.gmra.mrb[0].mxu0 %v551
        %v1072 = vpop.f32.mrb[0].mxu0
        %v1073 = vadd.f32 %v912, %v1072
        %v1074 = vpop.f32.mrb[0].mxu0
        %v1075 = vpop.f32.mrb[0].mxu0
        %v1076 = vadd.f32 %v915, %v1075
        %v1077 = vpop.f32.mrb[0].mxu0
        %1078 = vmatprep.mubr.bf16.mxu0 %v809
        %1079 = vmatmul.mubr.bf16.gmra.mrb[0].mxu0 %v555
        %v1080 = vpop.f32.mrb[0].mxu0
        %v1081 = vadd.f32 %v920, %v1080
        %v1082 = vpop.f32.mrb[0].mxu0
        %v1083 = vpop.f32.mrb[0].mxu0
        %v1084 = vadd.f32 %v923, %v1083
        %v1085 = vpop.f32.mrb[0].mxu0
        %1086 = vmatprep.mubr.bf16.mxu0 %v812
        %1087 = vmatmul.mubr.bf16.gmra.mrb[0].mxu0 %v559
        %v1088 = vpop.f32.mrb[0].mxu0
        %v1089 = vadd.f32 %v928, %v1088
        %v1090 = vpop.f32.mrb[0].mxu0
        %v1091 = vpop.f32.mrb[0].mxu0
        %v1092 = vadd.f32 %v931, %v1091
        %v1093 = vpop.f32.mrb[0].mxu0
        %1094 = vmatprep.mubr.bf16.mxu0 %v815
        %1095 = vmatmul.mubr.bf16.gmra.mrb[0].mxu0 %v563
        %v1096 = vpop.f32.mrb[0].mxu0
        %v1097 = vadd.f32 %v936, %v1096
        %v1098 = vpop.f32.mrb[0].mxu0
        %v1099 = vpop.f32.mrb[0].mxu0
        %v1100 = vadd.f32 %v939, %v1099
        %v1101 = vpop.f32.mrb[0].mxu0
        %1102 = vmatprep.mubr.bf16.mxu0 %v818
        %1103 = vmatmul.mubr.bf16.gmra.mrb[0].mxu0 %v567
        %v1104 = vpop.f32.mrb[0].mxu0
        %v1105 = vadd.f32 %v944, %v1104
        %v1106 = vpop.f32.mrb[0].mxu0
        %v1107 = vpop.f32.mrb[0].mxu0
        %v1108 = vadd.f32 %v947, %v1107
        %v1109 = vpop.f32.mrb[0].mxu0
        %1110 = vmatprep.mubr.bf16.mxu0 %v821
        %1111 = vmatmul.mubr.bf16.gmra.mrb[0].mxu0 %v571
        %v1112 = vpop.f32.mrb[0].mxu0
        %v1113 = vadd.f32 %v952, %v1112
        %v1114 = vpop.f32.mrb[0].mxu0
        %v1115 = vpop.f32.mrb[0].mxu0
        %v1116 = vadd.f32 %v955, %v1115
        %v1117 = vpop.f32.mrb[0].mxu0
        %1118 = vmatprep.mubr.bf16.mxu0 %v824
        %1119 = vmatmul.mubr.bf16.gmra.mrb[0].mxu0 %v575
        %v1120 = vpop.f32.mrb[0].mxu0
        %v1121 = vadd.f32 %v960, %v1120
        %v1122 = vpop.f32.mrb[0].mxu0
        %v1123 = vpop.f32.mrb[0].mxu0
        %v1124 = vadd.f32 %v963, %v1123
        %v1125 = vpop.f32.mrb[0].mxu0
        %1126 = vmatprep.mubr.bf16.mxu0 %v827
        %1127 = vmatmul.mubr.bf16.gmra.mrb[0].mxu0 %v579
        %v1128 = vpop.f32.mrb[0].mxu0
        %v1129 = vadd.f32 %v968, %v1128
        %v1130 = vpop.f32.mrb[0].mxu0
        %v1131 = vpop.f32.mrb[0].mxu0
        %v1132 = vadd.f32 %v971, %v1131
        %v1133 = vpop.f32.mrb[0].mxu0
        %1134 = vmatprep.mubr.bf16.mxu0 %v830
        %1135 = vmatmul.mubr.bf16.gmra.mrb[0].mxu0 %v583
        %v1136 = vpop.f32.mrb[0].mxu0
        %v1137 = vadd.f32 %v976, %v1136
        %v1138 = vpop.f32.mrb[0].mxu0
        %v1139 = vpop.f32.mrb[0].mxu0
        %v1140 = vadd.f32 %v979, %v1139
        %v1141 = vpop.f32.mrb[0].mxu0
        %1142 = vmatprep.mubr.bf16.mxu0 %v833
        %1143 = vmatmul.mubr.bf16.gmra.mrb[0].mxu0 %v587
        %v1144 = vpop.f32.mrb[0].mxu0
        %v1145 = vadd.f32 %v984, %v1144
        %v1146 = vpop.f32.mrb[0].mxu0
        %v1147 = vpop.f32.mrb[0].mxu0
        %v1148 = vadd.f32 %v987, %v1147
        %v1149 = vpop.f32.mrb[0].mxu0
        %1150 = vmatprep.mubr.bf16.mxu0 %v836
        %1151 = vmatmul.mubr.bf16.gmra.mrb[0].mxu0 %v591
        %v1152 = vpop.f32.mrb[0].mxu0
        %v1153 = vadd.f32 %v992, %v1152
        %v1154 = vpop.f32.mrb[0].mxu0
        %v1155 = vpop.f32.mrb[0].mxu0
        %v1156 = vadd.f32 %v995, %v1155
        %v1157 = vpop.f32.mrb[0].mxu0
        %1158 = vmatprep.mubr.bf16.mxu0 %v839
        %1159 = vmatmul.mubr.bf16.gmra.mrb[0].mxu0 %v595
        %v1160 = vpop.f32.mrb[0].mxu0
        %v1161 = vadd.f32 %v1000, %v1160
        %v1162 = vpop.f32.mrb[0].mxu0
        %v1163 = vpop.f32.mrb[0].mxu0
        %v1164 = vadd.f32 %v1003, %v1163
        %v1165 = vpop.f32.mrb[0].mxu0
        %1166 = vdwg.mxu0
        %v1167 = vmax.f32 %v1041, 0.0
        %v1168 = vmax.f32 %v1044, 0.0
        %v1169 = vmax.f32 %v1049, 0.0
        %v1170 = vmax.f32 %v1052, 0.0
        %v1171 = vmax.f32 %v1057, 0.0
        %v1172 = vmax.f32 %v1060, 0.0
        %v1173 = vmax.f32 %v1065, 0.0
        %v1174 = vmax.f32 %v1068, 0.0
        %v1175 = vmax.f32 %v1073, 0.0
        %v1176 = vmax.f32 %v1076, 0.0
        %v1177 = vmax.f32 %v1081, 0.0
        %v1178 = vmax.f32 %v1084, 0.0
        %v1179 = vmax.f32 %v1089, 0.0
        %v1180 = vmax.f32 %v1092, 0.0
        %v1181 = vmax.f32 %v1097, 0.0
        %v1182 = vmax.f32 %v1100, 0.0
        %v1183 = vmax.f32 %v1105, 0.0
        %v1184 = vmax.f32 %v1108, 0.0
        %v1185 = vmax.f32 %v1113, 0.0
        %v1186 = vmax.f32 %v1116, 0.0
        %v1187 = vmax.f32 %v1121, 0.0
        %v1188 = vmax.f32 %v1124, 0.0
        %v1189 = vmax.f32 %v1129, 0.0
        %v1190 = vmax.f32 %v1132, 0.0
        %v1191 = vmax.f32 %v1137, 0.0
        %v1192 = vmax.f32 %v1140, 0.0
        %v1193 = vmax.f32 %v1145, 0.0
        %v1194 = vmax.f32 %v1148, 0.0
        %v1195 = vmax.f32 %v1153, 0.0
        %v1196 = vmax.f32 %v1156, 0.0
        %v1197 = vmax.f32 %v1161, 0.0
        %v1198 = vmax.f32 %v1164, 0.0
        %v1199 = vpack.c.bf16 %v1168, %v1167
        %v1200 = vpack.c.bf16 %v1170, %v1169
        %v1201 = vpack.c.bf16 %v1172, %v1171
        %v1202 = vpack.c.bf16 %v1174, %v1173
        %v1203 = vpack.c.bf16 %v1176, %v1175
        %v1204 = vpack.c.bf16 %v1178, %v1177
        %v1205 = vpack.c.bf16 %v1180, %v1179
        %v1206 = vpack.c.bf16 %v1182, %v1181
        %v1207 = vpack.c.bf16 %v1184, %v1183
        %v1208 = vpack.c.bf16 %v1186, %v1185
        %v1209 = vpack.c.bf16 %v1188, %v1187
        %v1210 = vpack.c.bf16 %v1190, %v1189
        %v1211 = vpack.c.bf16 %v1192, %v1191
        %v1212 = vpack.c.bf16 %v1194, %v1193
        %v1213 = vpack.c.bf16 %v1196, %v1195
        %v1214 = vpack.c.bf16 %v1198, %v1197
        %v1231 = vunpack.c.l.b16 %v1199
        %v1232 = vunpack.c.h.b16 %v1199
        %v1233 = vunpack.c.l.b16 %v1200
        %v1234 = vunpack.c.h.b16 %v1200
        %v1235 = vunpack.c.l.b16 %v1201
        %v1236 = vunpack.c.h.b16 %v1201
        %v1237 = vunpack.c.l.b16 %v1202
        %v1238 = vunpack.c.h.b16 %v1202
        %v1239 = vunpack.c.l.b16 %v1203
        %v1240 = vunpack.c.h.b16 %v1203
        %v1241 = vunpack.c.l.b16 %v1204
        %v1242 = vunpack.c.h.b16 %v1204
        %v1243 = vunpack.c.l.b16 %v1205
        %v1244 = vunpack.c.h.b16 %v1205
        %v1245 = vunpack.c.l.b16 %v1206
        %v1246 = vunpack.c.h.b16 %v1206
        %v1247 = vunpack.c.l.b16 %v1207
        %v1248 = vunpack.c.h.b16 %v1207
        %v1249 = vunpack.c.l.b16 %v1208
        %v1250 = vunpack.c.h.b16 %v1208
        %v1251 = vunpack.c.l.b16 %v1209
        %v1252 = vunpack.c.h.b16 %v1209
        %v1253 = vunpack.c.l.b16 %v1210
        %v1254 = vunpack.c.h.b16 %v1210
        %v1255 = vunpack.c.l.b16 %v1211
        %v1256 = vunpack.c.h.b16 %v1211
        %v1257 = vunpack.c.l.b16 %v1212
        %v1258 = vunpack.c.h.b16 %v1212
        %v1259 = vunpack.c.l.b16 %v1213
        %v1260 = vunpack.c.h.b16 %v1213
        %v1261 = vunpack.c.l.b16 %v1214
        %v1262 = vunpack.c.h.b16 %v1214
        %v1263 = vpack.c.b16 %v1231, %v1231
        %v1264 = vpack.c.b16 %v1232, %v1232
        %v1265 = vpack.c.b16 %v1233, %v1233
        %v1266 = vpack.c.b16 %v1234, %v1234
        %v1267 = vpack.c.b16 %v1235, %v1235
        %v1268 = vpack.c.b16 %v1236, %v1236
        %v1269 = vpack.c.b16 %v1237, %v1237
        %v1270 = vpack.c.b16 %v1238, %v1238
        %v1271 = vpack.c.b16 %v1239, %v1239
        %v1272 = vpack.c.b16 %v1240, %v1240
        %v1273 = vpack.c.b16 %v1241, %v1241
        %v1274 = vpack.c.b16 %v1242, %v1242
        %v1275 = vpack.c.b16 %v1243, %v1243
        %v1276 = vpack.c.b16 %v1244, %v1244
        %v1277 = vpack.c.b16 %v1245, %v1245
        %v1278 = vpack.c.b16 %v1246, %v1246
        %v1279 = vpack.c.b16 %v1247, %v1247
        %v1280 = vpack.c.b16 %v1248, %v1248
        %v1281 = vpack.c.b16 %v1249, %v1249
        %v1282 = vpack.c.b16 %v1250, %v1250
        %v1283 = vpack.c.b16 %v1251, %v1251
        %v1284 = vpack.c.b16 %v1252, %v1252
        %v1285 = vpack.c.b16 %v1253, %v1253
        %v1286 = vpack.c.b16 %v1254, %v1254
        %v1287 = vpack.c.b16 %v1255, %v1255
        %v1288 = vpack.c.b16 %v1256, %v1256
        %v1289 = vpack.c.b16 %v1257, %v1257
        %v1290 = vpack.c.b16 %v1258, %v1258
        %v1291 = vpack.c.b16 %v1259, %v1259
        %v1292 = vpack.c.b16 %v1260, %v1260
        %v1293 = vpack.c.b16 %v1261, %v1261
        %v1294 = vpack.c.b16 %v1262, %v1262
        %1327 = vst [vmem:[%s204] sm:$0xf] %v1263
        %1328 = vst [vmem:[%s204 + $0x4] sm:$0xf] %v1264
        %1329 = vst [vmem:[%s204 + $0x8] sm:$0xf] %v1265
        %1330 = vst [vmem:[%s204 + $0xc] sm:$0xf] %v1266
        %1331 = vst [vmem:[%s204 + $0x10] sm:$0xf] %v1267
        %1332 = vst [vmem:[%s204 + $0x14] sm:$0xf] %v1268
        %1333 = vst [vmem:[%s204 + $0x18] sm:$0xf] %v1269
        %1334 = vst [vmem:[%s204 + $0x1c] sm:$0xf] %v1270
        %1335 = vst [vmem:[%s204 + $0x20] sm:$0xf] %v1271
        %1336 = vst [vmem:[%s204 + $0x24] sm:$0xf] %v1272
        %1337 = vst [vmem:[%s204 + $0x28] sm:$0xf] %v1273
        %1338 = vst [vmem:[%s204 + $0x2c] sm:$0xf] %v1274
        %1339 = vst [vmem:[%s204 + $0x30] sm:$0xf] %v1275
        %1340 = vst [vmem:[%s204 + $0x34] sm:$0xf] %v1276
        %1341 = vst [vmem:[%s204 + $0x38] sm:$0xf] %v1277
        %1342 = vst [vmem:[%s204 + $0x3c] sm:$0xf] %v1278
        %1343 = vst [vmem:[%s204 + $0x40] sm:$0xf] %v1279
        %1344 = vst [vmem:[%s204 + $0x44] sm:$0xf] %v1280
        %1345 = vst [vmem:[%s204 + $0x48] sm:$0xf] %v1281
        %1346 = vst [vmem:[%s204 + $0x4c] sm:$0xf] %v1282
        %1347 = vst [vmem:[%s204 + $0x50] sm:$0xf] %v1283
        %1348 = vst [vmem:[%s204 + $0x54] sm:$0xf] %v1284
        %1349 = vst [vmem:[%s204 + $0x58] sm:$0xf] %v1285
        %1350 = vst [vmem:[%s204 + $0x5c] sm:$0xf] %v1286
        %1351 = vst [vmem:[%s204 + $0x60] sm:$0xf] %v1287
        %1352 = vst [vmem:[%s204 + $0x64] sm:$0xf] %v1288
        %1353 = vst [vmem:[%s204 + $0x68] sm:$0xf] %v1289
        %1354 = vst [vmem:[%s204 + $0x6c] sm:$0xf] %v1290
        %1355 = vst [vmem:[%s204 + $0x70] sm:$0xf] %v1291
        %1356 = vst [vmem:[%s204 + $0x74] sm:$0xf] %v1292
        %1357 = vst [vmem:[%s204 + $0x78] sm:$0xf] %v1293
        %1358 = vst [vmem:[%s204 + $0x7c] sm:$0xf] %v1294
        %s1359 = sand.u32 %s117, 1
        %s1360 = scalar_lea.sflag [#allocation3], %s1359
        %s1361 = sand.u32 %s117, 1
        %s1362 = smul.addr %s1361, 128
        %s1363 = scalar_lea.vmem [#allocation2], %s1362
        // Predicated region
        $region33: #{tpu_custom_call.1} parent=31 // pred_check
          %p1364 = pneg %p127
        $region34: #{tpu_custom_call.1} parent=31 // pred_check_branch
          %1366 = sbr.rel (%p1364) target = $region36
        $region35: #{tpu_custom_call.1} parent=31 // pred_region
          %s1367 = smul.u32 32, %s21
          %s1369 = ssub.s32 2048, 2048
          %1370 = vsyncadd %s1360, %s1369
          %s1371 = sadd.s32 %s22, %s1367
          %s1372 = smul.addr %s1371, 64
          %s1373 = scalar_lea.hbm %s3, %s1372
          %s1374 = sshll.u32 %s1363, 4
          %s1375 = int_to_ptr.vmem [resolvable:$true] %s1374
          %1380 = dma.vmem_to_hbm [thread:$0]  %s1375, 2048, %s1373, %s1360, 64, 64, 4
        $region36: #{tpu_custom_call.1} parent=31 // pred_fallthru
          _
      $region32: #{tpu_custom_call.1} parent=5 // pred_fallthru
        _
      %p1381 = scmp.le.s32.totalorder 2, %s12
      // Predicated region
      $region37: #{tpu_custom_call.1} parent=5 // pred_check
        %p1382 = pneg %p1381
      $region38: #{tpu_custom_call.1} parent=5 // pred_check_branch
        %1384 = sbr.rel (%p1382) target = $region40
      $region39: #{tpu_custom_call.1} parent=5 // pred_region
        %s1385 = ssub.s32 %s12, 2
        // Predicated region
        $region41: #{tpu_custom_call.1} parent=39 // pred_check
          %p1386 = pneg %p133
        $region42: #{tpu_custom_call.1} parent=39 // pred_check_branch
          %1388 = sbr.rel (%p1386) target = $region44
        $region43: #{tpu_custom_call.1} parent=39 // pred_region
          %s1389 = sand.u32 %s118, 1
          %s1390 = scalar_lea.sflag [#allocation3], %s1389
          %s1391 = sand.u32 %s118, 1
          %s1392 = smul.addr %s1391, 128
          %s1393 = scalar_lea.vmem [#allocation2], %s1392
          %1394 = dma.done %s1390, 2048
        $region44: #{tpu_custom_call.1} parent=39 // pred_fallthru
          _
      $region40: #{tpu_custom_call.1} parent=5 // pred_fallthru
        _
    $region6: #{tpu_custom_call.1} parent=1 // loop_footer
      %s16 = sadd.s32 1, %s12
    $region7: #{tpu_custom_call.1} parent=1 // loop_footer_branch
      %11 = sbr.rel target = $region3
    $region8: #{tpu_custom_call.1} parent=1 // loop_exit
      _
    %1395 = vsyncpa [#allocation3], 1
    %s1396 = scalar_lea.sflag [#allocation3], 1
    %1397 = vsyncpa %s1396, 1

</llo_original>
